<compile_context>
chip_gen: v7x
topology: tpu7x:2x2x1
jax: 0.10.0
libtpu: 0.0.40
codegen_flags: <defaults>
</compile_context>

<pallas_src>
import jax
import jax.numpy as jnp
from jax import lax
from jax.experimental import pallas as pl
from jax.experimental.pallas import tpu as pltpu


def _make_kernel(H, W, HW, HWp, C, compute_dtype, use_stack):
    P = W + 1                 # flattened zero pad each side (covers all 9 tap offsets)
    Lp = HWp + 2 * P

    def kernel(x_ref, w1_ref, w2_ref, s_ref, m_ref, o_ref, pad_ref, *stack):
        stack_ref = stack[0] if use_stack else None

        # ---- in-kernel zero padding of the flattened image (persistent VMEM) ----
        zpad = jnp.zeros((C, P), compute_dtype)
        pad_ref[:, :P] = zpad
        pad_ref[:, P + HWp:] = zpad
        pad_ref[:, P:P + HWp] = x_ref[0]

        m_l = m_ref[0:1, :]            # kills dw = -1 taps where w == 0
        m_r = m_ref[1:2, :]            # kills dw = +1 taps where w == W-1

        def conv3x3(w_ref):
            if use_stack:
                # 9 shifted+masked taps -> one (9C, HWp) stack -> ONE MXU matmul.
                for kh in range(3):
                    for kw in range(3):
                        t = kh * 3 + kw
                        off = P + (kh - 1) * W + (kw - 1)   # static lane offset
                        tap = pad_ref[:, off:off + HWp]
                        if kw == 0:
                            tap = tap * m_l
                        elif kw == 2:
                            tap = tap * m_r
                        stack_ref[t * C:(t + 1) * C, :] = tap
                return jnp.dot(w_ref[...], stack_ref[...],
                               preferred_element_type=jnp.float32)
            # Large-C fallback: straight accumulation chain (MRB accumulate on v7x).
            acc = jnp.zeros((C, HWp), jnp.float32)
            for kh in range(3):
                for kw in range(3):
                    t = kh * 3 + kw
                    off = P + (kh - 1) * W + (kw - 1)
                    tap = pad_ref[:, off:off + HWp]
                    if kw == 0:
                        tap = tap * m_l
                    elif kw == 2:
                        tap = tap * m_r
                    acc = acc + jnp.dot(w_ref[:, t * C:(t + 1) * C], tap,
                                        preferred_element_type=jnp.float32)
            return acc

        # conv1 (BN1 scale folded into weights) + shift + ReLU, all in f32.
        y1 = jnp.maximum(conv3x3(w1_ref) + s_ref[0], 0.0)
        if HWp != HW:
            y1 = y1 * m_ref[2:3, :]    # zero the lane-pad columns before conv2
        # Reuse the same pad scratch as conv2's zero-padded input (no concat copy).
        pad_ref[:, P:P + HWp] = y1.astype(compute_dtype)

        # conv2 (BN2 folded) + shift, residual from the lane-aligned input block.
        y2 = conv3x3(w2_ref) + s_ref[1]
        res = x_ref[0].astype(jnp.float32)
        o_ref[0] = jnp.maximum(y2 + res, 0.0).astype(o_ref.dtype)

    return kernel


def basic_block_forward(x, p, eps=1e-5, compute_dtype=jnp.bfloat16):
    """x: (N, C, H, W) NCHW (PyTorch layout). p: parameter dict (eval-mode BN)."""
    N, c_in, H, W = x.shape
    c_out = p["conv1_w"].shape[0]
    assert c_in == c_out, "BasicBlock residual requires filter_in == filter_out"
    C = c_out
    HW = H * W
    HWp = ((HW + 127) // 128) * 128        # lane-dense (multiple-of-128) spatial dim
    P = W + 1
    Lp = HWp + 2 * P
    esize = jnp.dtype(compute_dtype).itemsize
    packing = 4 // esize                   # rows per 32-bit sublane (1 f32, 2 bf16)
    use_stack = (C < 128) and (C % packing == 0)

    def fold(w, b, gamma, beta, mean, var):
        inv = 1.0 / jnp.sqrt(var.astype(jnp.float32) + eps)
        scale = gamma.astype(jnp.float32) * inv
        w_eff = w.astype(jnp.float32) * scale[:, None, None, None]
        shift = beta.astype(jnp.float32) + scale * (
            b.astype(jnp.float32) - mean.astype(jnp.float32))
        # (C, Cin, 3, 3) -> (C, 9*Cin); column index = (kh*3 + kw)*Cin + cin,
        # matching the stack row order t*C + c built in the kernel.
        w2d = jnp.transpose(w_eff, (0, 2, 3, 1)).reshape(C, 9 * w.shape[1])
        return w2d.astype(compute_dtype), shift.reshape(C, 1)

    w1, s1 = fold(p["conv1_w"], p["conv1_b"], p["bn1_gamma"], p["bn1_beta"],
                  p["bn1_mean"], p["bn1_var"])
    w2, s2 = fold(p["conv2_w"], p["conv2_b"], p["bn2_gamma"], p["bn2_beta"],
                  p["bn2_mean"], p["bn2_var"])
    shifts = jnp.stack([s1, s2])           # (2, C, 1) f32

    # Unpadded activation; only lane-pad up to a multiple of 128 (no-op if aligned).
    x_flat = x.reshape(N, C, HW).astype(compute_dtype)
    if HWp != HW:
        x_flat = jnp.pad(x_flat, ((0, 0), (0, 0), (0, HWp - HW)))

    # {0,1} masks: kill horizontal wrap of the flattened shifts + lane-pad columns.
    pos = jnp.arange(HWp, dtype=jnp.int32)
    masks = jnp.stack([(pos % W) != 0,       # valid source column for dw = -1
                       (pos % W) != W - 1,   # valid source column for dw = +1
                       pos < HW]             # real (non lane-pad) columns
                      ).astype(compute_dtype)                     # (3, HWp)

    kernel = _make_kernel(H, W, HW, HWp, C, compute_dtype, use_stack)

    scratch = [pltpu.VMEM((C, Lp), compute_dtype)]
    if use_stack:
        scratch.append(pltpu.VMEM((9 * C, HWp), compute_dtype))

    # VMEM budget from actual block / scratch sizes (+ f32 intermediate headroom).
    vmem_bytes = (2 * C * HWp * esize                       # x block (double buffer)
                  + 2 * (w1.size + w2.size) * esize         # weights
                  + 2 * (shifts.size * 4 + masks.size * esize)
                  + 2 * C * HWp * 4                         # f32 output block
                  + C * Lp * esize                          # pad scratch
                  + (9 * C * HWp * esize if use_stack else 0)
                  + 6 * C * HWp * 4)                        # f32 intermediates
    vmem_limit = int(min(100 * 1024 * 1024, max(2 * vmem_bytes, 32 * 1024 * 1024)))

    flops = N * (2 * 2 * 9 * C * C * HW + 6 * C * HW)
    bytes_accessed = (x_flat.size * esize + N * C * HWp * 4
                      + (w1.size + w2.size + masks.size) * esize + shifts.size * 4)

    out_flat = pl.pallas_call(
        kernel,
        out_shape=jax.ShapeDtypeStruct((N, C, HWp), jnp.float32),
        grid_spec=pltpu.PrefetchScalarGridSpec(
            num_scalar_prefetch=0,
            grid=(N,),
            in_specs=[
                pl.BlockSpec((1, C, HWp), lambda n: (n, 0, 0)),
                pl.BlockSpec((C, 9 * C), lambda n: (0, 0)),
                pl.BlockSpec((C, 9 * C), lambda n: (0, 0)),
                pl.BlockSpec((2, C, 1), lambda n: (0, 0, 0)),
                pl.BlockSpec((3, HWp), lambda n: (0, 0)),
            ],
            out_specs=pl.BlockSpec((1, C, HWp), lambda n: (n, 0, 0)),
            scratch_shapes=scratch,
        ),
        compiler_params=pltpu.CompilerParams(
            dimension_semantics=("parallel",),
            vmem_limit_bytes=vmem_limit),
        cost_estimate=pl.CostEstimate(
            flops=int(flops), transcendentals=0,
            bytes_accessed=int(bytes_accessed)),
    )(x_flat, w1, w2, shifts, masks)

    if HWp != HW:
        out_flat = out_flat[:, :, :HW]
    return out_flat.reshape(N, C, H, W)


def reference_forward(x, p, eps=1e-5):
    """Pure-JAX reference (eval-mode BN), full f32 precision."""
    def conv_bn(z, w, b, gamma, beta, mean, var):
        y = lax.conv_general_dilated(
            z, w, window_strides=(1, 1), padding="SAME",
            dimension_numbers=("NCHW", "OIHW", "NCHW"),
            precision=lax.Precision.HIGHEST)
        y = y + b[None, :, None, None]
        inv = 1.0 / jnp.sqrt(var + eps)
        return ((gamma * inv)[None, :, None, None]
                * (y - mean[None, :, None, None])
                + beta[None, :, None, None])

    y = jnp.maximum(conv_bn(x, p["conv1_w"], p["conv1_b"], p["bn1_gamma"],
                            p["bn1_beta"], p["bn1_mean"], p["bn1_var"]), 0.0)
    y = conv_bn(y, p["conv2_w"], p["conv2_b"], p["bn2_gamma"],
                p["bn2_beta"], p["bn2_mean"], p["bn2_var"])
    return jnp.maximum(y + x, 0.0)


if __name__ == "__main__":
    N, C, H, W = 2, 4, 16, 16
    key = jax.random.PRNGKey(0)
    keys = jax.random.split(key, 7)

    x = jax.random.normal(keys[0], (N, C, H, W), dtype=jnp.float32)

    def bn_params(k):
        kg, kb, km, kv = jax.random.split(k, 4)
        return (1.0 + 0.1 * jax.random.normal(kg, (C,), jnp.float32),
                0.1 * jax.random.normal(kb, (C,), jnp.float32),
                0.1 * jax.random.normal(km, (C,), jnp.float32),
                jnp.abs(jax.random.normal(kv, (C,), jnp.float32)) + 0.5)

    g1, be1, m1, v1 = bn_params(keys[1])
    g2, be2, m2, v2 = bn_params(keys[2])
    params = {
        "conv1_w": 0.2 * jax.random.normal(keys[3], (C, C, 3, 3), jnp.float32),
        "conv1_b": 0.1 * jax.random.normal(keys[4], (C,), jnp.float32),
        "bn1_gamma": g1, "bn1_beta": be1, "bn1_mean": m1, "bn1_var": v1,
        "conv2_w": 0.2 * jax.random.normal(keys[5], (C, C, 3, 3), jnp.float32),
        "conv2_b": 0.1 * jax.random.normal(keys[6], (C,), jnp.float32),
        "bn2_gamma": g2, "bn2_beta": be2, "bn2_mean": m2, "bn2_var": v2,
    }

    ref = reference_forward(x, params)

    # Default path: bf16 MXU operands, f32 accumulation/BN/residual/ReLU.
    # (Residual adds the bf16-rounded input -> loose tolerance vs the f32 reference.)
    out_bf16 = jax.block_until_ready(basic_block_forward(x, params))
    assert out_bf16.shape == (N, C, H, W), out_bf16.shape
    assert jnp.allclose(out_bf16, ref, atol=2e-1, rtol=5e-2), \
        float(jnp.max(jnp.abs(out_bf16 - ref)))

    # f32 MXU operands: tight check against the f32 reference.
    out_f32 = jax.block_until_ready(
        basic_block_forward(x, params, compute_dtype=jnp.float32))
    assert jnp.allclose(out_f32, ref, atol=2e-3, rtol=2e-3), \
        float(jnp.max(jnp.abs(out_f32 - ref)))

    print("KERNEL_OK")
</pallas_src>

<mosaic_0001>
module attributes {stable_mosaic.version = 11 : i64} {
  func.func @kernel(%arg0: i32, %arg1: memref<1x4x256xbf16, #tpu.memory_space<vmem>>, %arg2: memref<4x36xbf16, #tpu.memory_space<vmem>>, %arg3: memref<4x36xbf16, #tpu.memory_space<vmem>>, %arg4: memref<2x4x1xf32, #tpu.memory_space<vmem>>, %arg5: memref<3x256xbf16, #tpu.memory_space<vmem>>, %arg6: memref<1x4x256xf32, #tpu.memory_space<vmem>>, %arg7: memref<4x290xbf16, #tpu.memory_space<vmem>>, %arg8: memref<36x256xbf16, #tpu.memory_space<vmem>>) attributes {dimension_semantics = [#tpu.dimension_semantics<parallel>], iteration_bounds = array<i64: 2>, scalar_prefetch = 0 : i64, scratch_operands = 2 : i64, tpu.core_type = #tpu.core_type<tc>, window_params = [{transform_indices = @transform_0, window_bounds = array<i64: 1, 4, 256>}, {pipeline_mode = #tpu.pipeline_mode<synchronous>, transform_indices = @transform_1, window_bounds = array<i64: 4, 36>}, {pipeline_mode = #tpu.pipeline_mode<synchronous>, transform_indices = @transform_2, window_bounds = array<i64: 4, 36>}, {pipeline_mode = #tpu.pipeline_mode<synchronous>, transform_indices = @transform_3, window_bounds = array<i64: 2, 4, 1>}, {pipeline_mode = #tpu.pipeline_mode<synchronous>, transform_indices = @transform_4, window_bounds = array<i64: 3, 256>}, {transform_indices = @transform_5, window_bounds = array<i64: 1, 4, 256>}]} {
    %cst = arith.constant 0.000000e+00 : bf16
    %0 = vector.broadcast %cst : bf16 to vector<4x17xbf16>
    %c0 = arith.constant 0 : index
    %c0_0 = arith.constant 0 : index
    %1 = vector.load %arg7[%c0, %c0_0] : memref<4x290xbf16, #tpu.memory_space<vmem>>, vector<4x17xbf16>
    tpu.vector_store %arg7[%c0, %c0_0], %0 {strides = array<i32>} : memref<4x290xbf16, #tpu.memory_space<vmem>>, vector<4x17xbf16>,
    %c0_1 = arith.constant 0 : index
    %c273 = arith.constant 273 : index
    %2 = vector.load %arg7[%c0_1, %c273] : memref<4x290xbf16, #tpu.memory_space<vmem>>, vector<4x17xbf16>
    tpu.vector_store %arg7[%c0_1, %c273], %0 {strides = array<i32>} : memref<4x290xbf16, #tpu.memory_space<vmem>>, vector<4x17xbf16>,
    %c0_2 = arith.constant 0 : index
    %c0_3 = arith.constant 0 : index
    %c0_4 = arith.constant 0 : index
    %3 = vector.load %arg1[%c0_2, %c0_3, %c0_4] : memref<1x4x256xbf16, #tpu.memory_space<vmem>>, vector<1x4x256xbf16>
    %4 = vector.shape_cast %3 : vector<1x4x256xbf16> to vector<4x256xbf16>
    %c0_5 = arith.constant 0 : index
    %c17 = arith.constant 17 : index
    %5 = vector.load %arg7[%c0_5, %c17] : memref<4x290xbf16, #tpu.memory_space<vmem>>, vector<4x256xbf16>
    tpu.vector_store %arg7[%c0_5, %c17], %4 {strides = array<i32>} : memref<4x290xbf16, #tpu.memory_space<vmem>>, vector<4x256xbf16>,
    %c0_6 = arith.constant 0 : index
    %c0_7 = arith.constant 0 : index
    %6 = vector.load %arg5[%c0_6, %c0_7] : memref<3x256xbf16, #tpu.memory_space<vmem>>, vector<1x256xbf16>
    %c1 = arith.constant 1 : index
    %c0_8 = arith.constant 0 : index
    %7 = vector.load %arg5[%c1, %c0_8] : memref<3x256xbf16, #tpu.memory_space<vmem>>, vector<1x256xbf16>
    %c0_9 = arith.constant 0 : index
    %c0_10 = arith.constant 0 : index
    %8 = vector.load %arg7[%c0_9, %c0_10] : memref<4x290xbf16, #tpu.memory_space<vmem>>, vector<4x256xbf16>
    %9 = vector.broadcast %6 : vector<1x256xbf16> to vector<4x256xbf16>
    %10 = arith.mulf %8, %9 : vector<4x256xbf16>
    %c0_11 = arith.constant 0 : index
    %c0_12 = arith.constant 0 : index
    %11 = vector.load %arg8[%c0_11, %c0_12] : memref<36x256xbf16, #tpu.memory_space<vmem>>, vector<4x256xbf16>
    tpu.vector_store %arg8[%c0_11, %c0_12], %10 {strides = array<i32>} : memref<36x256xbf16, #tpu.memory_space<vmem>>, vector<4x256xbf16>,
    %c0_13 = arith.constant 0 : index
    %c1_14 = arith.constant 1 : index
    %12 = vector.load %arg7[%c0_13, %c1_14] : memref<4x290xbf16, #tpu.memory_space<vmem>>, vector<4x256xbf16>
    %c4 = arith.constant 4 : index
    %c0_15 = arith.constant 0 : index
    %13 = vector.load %arg8[%c4, %c0_15] : memref<36x256xbf16, #tpu.memory_space<vmem>>, vector<4x256xbf16>
    tpu.vector_store %arg8[%c4, %c0_15], %12 {strides = array<i32>} : memref<36x256xbf16, #tpu.memory_space<vmem>>, vector<4x256xbf16>,
    %c0_16 = arith.constant 0 : index
    %c2 = arith.constant 2 : index
    %14 = vector.load %arg7[%c0_16, %c2] : memref<4x290xbf16, #tpu.memory_space<vmem>>, vector<4x256xbf16>
    %15 = vector.broadcast %7 : vector<1x256xbf16> to vector<4x256xbf16>
    %16 = arith.mulf %14, %15 : vector<4x256xbf16>
    %c8 = arith.constant 8 : index
    %c0_17 = arith.constant 0 : index
    %17 = vector.load %arg8[%c8, %c0_17] : memref<36x256xbf16, #tpu.memory_space<vmem>>, vector<4x256xbf16>
    tpu.vector_store %arg8[%c8, %c0_17], %16 {strides = array<i32>} : memref<36x256xbf16, #tpu.memory_space<vmem>>, vector<4x256xbf16>,
    %c0_18 = arith.constant 0 : index
    %c16 = arith.constant 16 : index
    %18 = vector.load %arg7[%c0_18, %c16] : memref<4x290xbf16, #tpu.memory_space<vmem>>, vector<4x256xbf16>
    %19 = vector.broadcast %6 : vector<1x256xbf16> to vector<4x256xbf16>
    %20 = arith.mulf %18, %19 : vector<4x256xbf16>
    %c12 = arith.constant 12 : index
    %c0_19 = arith.constant 0 : index
    %21 = vector.load %arg8[%c12, %c0_19] : memref<36x256xbf16, #tpu.memory_space<vmem>>, vector<4x256xbf16>
    tpu.vector_store %arg8[%c12, %c0_19], %20 {strides = array<i32>} : memref<36x256xbf16, #tpu.memory_space<vmem>>, vector<4x256xbf16>,
    %c0_20 = arith.constant 0 : index
    %c17_21 = arith.constant 17 : index
    %22 = vector.load %arg7[%c0_20, %c17_21] : memref<4x290xbf16, #tpu.memory_space<vmem>>, vector<4x256xbf16>
    %c16_22 = arith.constant 16 : index
    %c0_23 = arith.constant 0 : index
    %23 = vector.load %arg8[%c16_22, %c0_23] : memref<36x256xbf16, #tpu.memory_space<vmem>>, vector<4x256xbf16>
    tpu.vector_store %arg8[%c16_22, %c0_23], %22 {strides = array<i32>} : memref<36x256xbf16, #tpu.memory_space<vmem>>, vector<4x256xbf16>,
    %c0_24 = arith.constant 0 : index
    %c18 = arith.constant 18 : index
    %24 = vector.load %arg7[%c0_24, %c18] : memref<4x290xbf16, #tpu.memory_space<vmem>>, vector<4x256xbf16>
    %25 = vector.broadcast %7 : vector<1x256xbf16> to vector<4x256xbf16>
    %26 = arith.mulf %24, %25 : vector<4x256xbf16>
    %c20 = arith.constant 20 : index
    %c0_25 = arith.constant 0 : index
    %27 = vector.load %arg8[%c20, %c0_25] : memref<36x256xbf16, #tpu.memory_space<vmem>>, vector<4x256xbf16>
    tpu.vector_store %arg8[%c20, %c0_25], %26 {strides = array<i32>} : memref<36x256xbf16, #tpu.memory_space<vmem>>, vector<4x256xbf16>,
    %c0_26 = arith.constant 0 : index
    %c32 = arith.constant 32 : index
    %28 = vector.load %arg7[%c0_26, %c32] : memref<4x290xbf16, #tpu.memory_space<vmem>>, vector<4x256xbf16>
    %29 = vector.broadcast %6 : vector<1x256xbf16> to vector<4x256xbf16>
    %30 = arith.mulf %28, %29 : vector<4x256xbf16>
    %c24 = arith.constant 24 : index
    %c0_27 = arith.constant 0 : index
    %31 = vector.load %arg8[%c24, %c0_27] : memref<36x256xbf16, #tpu.memory_space<vmem>>, vector<4x256xbf16>
    tpu.vector_store %arg8[%c24, %c0_27], %30 {strides = array<i32>} : memref<36x256xbf16, #tpu.memory_space<vmem>>, vector<4x256xbf16>,
    %c0_28 = arith.constant 0 : index
    %c33 = arith.constant 33 : index
    %32 = vector.load %arg7[%c0_28, %c33] : memref<4x290xbf16, #tpu.memory_space<vmem>>, vector<4x256xbf16>
    %c28 = arith.constant 28 : index
    %c0_29 = arith.constant 0 : index
    %33 = vector.load %arg8[%c28, %c0_29] : memref<36x256xbf16, #tpu.memory_space<vmem>>, vector<4x256xbf16>
    tpu.vector_store %arg8[%c28, %c0_29], %32 {strides = array<i32>} : memref<36x256xbf16, #tpu.memory_space<vmem>>, vector<4x256xbf16>,
    %c0_30 = arith.constant 0 : index
    %c34 = arith.constant 34 : index
    %34 = vector.load %arg7[%c0_30, %c34] : memref<4x290xbf16, #tpu.memory_space<vmem>>, vector<4x256xbf16>
    %35 = vector.broadcast %7 : vector<1x256xbf16> to vector<4x256xbf16>
    %36 = arith.mulf %34, %35 : vector<4x256xbf16>
    %c32_31 = arith.constant 32 : index
    %c0_32 = arith.constant 0 : index
    %37 = vector.load %arg8[%c32_31, %c0_32] : memref<36x256xbf16, #tpu.memory_space<vmem>>, vector<4x256xbf16>
    tpu.vector_store %arg8[%c32_31, %c0_32], %36 {strides = array<i32>} : memref<36x256xbf16, #tpu.memory_space<vmem>>, vector<4x256xbf16>,
    %c0_33 = arith.constant 0 : index
    %c0_34 = arith.constant 0 : index
    %38 = vector.load %arg2[%c0_33, %c0_34] : memref<4x36xbf16, #tpu.memory_space<vmem>>, vector<4x36xbf16>
    %c0_35 = arith.constant 0 : index
    %c0_36 = arith.constant 0 : index
    %39 = vector.load %arg8[%c0_35, %c0_36] : memref<36x256xbf16, #tpu.memory_space<vmem>>, vector<36x256xbf16>
    %cst_37 = arith.constant dense<0.000000e+00> : vector<4x256xf32>
    %40 = tpu.matmul %38, %39, %cst_37 {dimension_numbers = #tpu.dot_dimension_numbers<[1], [0], [0], [1], [0, 0, 1, 1], [], []>} : vector<4x36xbf16>, vector<36x256xbf16>, vector<4x256xf32> -> vector<4x256xf32>
    %c0_38 = arith.constant 0 : index
    %c0_39 = arith.constant 0 : index
    %c0_40 = arith.constant 0 : index
    %41 = vector.load %arg4[%c0_38, %c0_39, %c0_40] : memref<2x4x1xf32, #tpu.memory_space<vmem>>, vector<1x4x1xf32>
    %42 = vector.shape_cast %41 : vector<1x4x1xf32> to vector<4x1xf32>
    %43 = vector.broadcast %42 : vector<4x1xf32> to vector<4x256xf32>
    %44 = arith.addf %40, %43 : vector<4x256xf32>
    %cst_41 = arith.constant 0.000000e+00 : f32
    %45 = vector.broadcast %cst_41 : f32 to vector<4x256xf32>
    %46 = arith.maximumf %44, %45 : vector<4x256xf32>
    %47 = arith.truncf %46 : vector<4x256xf32> to vector<4x256xbf16>
    %c0_42 = arith.constant 0 : index
    %c17_43 = arith.constant 17 : index
    %48 = vector.load %arg7[%c0_42, %c17_43] : memref<4x290xbf16, #tpu.memory_space<vmem>>, vector<4x256xbf16>
    tpu.vector_store %arg7[%c0_42, %c17_43], %47 {strides = array<i32>} : memref<4x290xbf16, #tpu.memory_space<vmem>>, vector<4x256xbf16>,
    %c0_44 = arith.constant 0 : index
    %c0_45 = arith.constant 0 : index
    %49 = vector.load %arg7[%c0_44, %c0_45] : memref<4x290xbf16, #tpu.memory_space<vmem>>, vector<4x256xbf16>
    %50 = vector.broadcast %6 : vector<1x256xbf16> to vector<4x256xbf16>
    %51 = arith.mulf %49, %50 : vector<4x256xbf16>
    %c0_46 = arith.constant 0 : index
    %c0_47 = arith.constant 0 : index
    %52 = vector.load %arg8[%c0_46, %c0_47] : memref<36x256xbf16, #tpu.memory_space<vmem>>, vector<4x256xbf16>
    tpu.vector_store %arg8[%c0_46, %c0_47], %51 {strides = array<i32>} : memref<36x256xbf16, #tpu.memory_space<vmem>>, vector<4x256xbf16>,
    %c0_48 = arith.constant 0 : index
    %c1_49 = arith.constant 1 : index
    %53 = vector.load %arg7[%c0_48, %c1_49] : memref<4x290xbf16, #tpu.memory_space<vmem>>, vector<4x256xbf16>
    %c4_50 = arith.constant 4 : index
    %c0_51 = arith.constant 0 : index
    %54 = vector.load %arg8[%c4_50, %c0_51] : memref<36x256xbf16, #tpu.memory_space<vmem>>, vector<4x256xbf16>
    tpu.vector_store %arg8[%c4_50, %c0_51], %53 {strides = array<i32>} : memref<36x256xbf16, #tpu.memory_space<vmem>>, vector<4x256xbf16>,
    %c0_52 = arith.constant 0 : index
    %c2_53 = arith.constant 2 : index
    %55 = vector.load %arg7[%c0_52, %c2_53] : memref<4x290xbf16, #tpu.memory_space<vmem>>, vector<4x256xbf16>
    %56 = vector.broadcast %7 : vector<1x256xbf16> to vector<4x256xbf16>
    %57 = arith.mulf %55, %56 : vector<4x256xbf16>
    %c8_54 = arith.constant 8 : index
    %c0_55 = arith.constant 0 : index
    %58 = vector.load %arg8[%c8_54, %c0_55] : memref<36x256xbf16, #tpu.memory_space<vmem>>, vector<4x256xbf16>
    tpu.vector_store %arg8[%c8_54, %c0_55], %57 {strides = array<i32>} : memref<36x256xbf16, #tpu.memory_space<vmem>>, vector<4x256xbf16>,
    %c0_56 = arith.constant 0 : index
    %c16_57 = arith.constant 16 : index
    %59 = vector.load %arg7[%c0_56, %c16_57] : memref<4x290xbf16, #tpu.memory_space<vmem>>, vector<4x256xbf16>
    %60 = vector.broadcast %6 : vector<1x256xbf16> to vector<4x256xbf16>
    %61 = arith.mulf %59, %60 : vector<4x256xbf16>
    %c12_58 = arith.constant 12 : index
    %c0_59 = arith.constant 0 : index
    %62 = vector.load %arg8[%c12_58, %c0_59] : memref<36x256xbf16, #tpu.memory_space<vmem>>, vector<4x256xbf16>
    tpu.vector_store %arg8[%c12_58, %c0_59], %61 {strides = array<i32>} : memref<36x256xbf16, #tpu.memory_space<vmem>>, vector<4x256xbf16>,
    %c0_60 = arith.constant 0 : index
    %c17_61 = arith.constant 17 : index
    %63 = vector.load %arg7[%c0_60, %c17_61] : memref<4x290xbf16, #tpu.memory_space<vmem>>, vector<4x256xbf16>
    %c16_62 = arith.constant 16 : index
    %c0_63 = arith.constant 0 : index
    %64 = vector.load %arg8[%c16_62, %c0_63] : memref<36x256xbf16, #tpu.memory_space<vmem>>, vector<4x256xbf16>
    tpu.vector_store %arg8[%c16_62, %c0_63], %63 {strides = array<i32>} : memref<36x256xbf16, #tpu.memory_space<vmem>>, vector<4x256xbf16>,
    %c0_64 = arith.constant 0 : index
    %c18_65 = arith.constant 18 : index
    %65 = vector.load %arg7[%c0_64, %c18_65] : memref<4x290xbf16, #tpu.memory_space<vmem>>, vector<4x256xbf16>
    %66 = vector.broadcast %7 : vector<1x256xbf16> to vector<4x256xbf16>
    %67 = arith.mulf %65, %66 : vector<4x256xbf16>
    %c20_66 = arith.constant 20 : index
    %c0_67 = arith.constant 0 : index
    %68 = vector.load %arg8[%c20_66, %c0_67] : memref<36x256xbf16, #tpu.memory_space<vmem>>, vector<4x256xbf16>
    tpu.vector_store %arg8[%c20_66, %c0_67], %67 {strides = array<i32>} : memref<36x256xbf16, #tpu.memory_space<vmem>>, vector<4x256xbf16>,
    %c0_68 = arith.constant 0 : index
    %c32_69 = arith.constant 32 : index
    %69 = vector.load %arg7[%c0_68, %c32_69] : memref<4x290xbf16, #tpu.memory_space<vmem>>, vector<4x256xbf16>
    %70 = vector.broadcast %6 : vector<1x256xbf16> to vector<4x256xbf16>
    %71 = arith.mulf %69, %70 : vector<4x256xbf16>
    %c24_70 = arith.constant 24 : index
    %c0_71 = arith.constant 0 : index
    %72 = vector.load %arg8[%c24_70, %c0_71] : memref<36x256xbf16, #tpu.memory_space<vmem>>, vector<4x256xbf16>
    tpu.vector_store %arg8[%c24_70, %c0_71], %71 {strides = array<i32>} : memref<36x256xbf16, #tpu.memory_space<vmem>>, vector<4x256xbf16>,
    %c0_72 = arith.constant 0 : index
    %c33_73 = arith.constant 33 : index
    %73 = vector.load %arg7[%c0_72, %c33_73] : memref<4x290xbf16, #tpu.memory_space<vmem>>, vector<4x256xbf16>
    %c28_74 = arith.constant 28 : index
    %c0_75 = arith.constant 0 : index
    %74 = vector.load %arg8[%c28_74, %c0_75] : memref<36x256xbf16, #tpu.memory_space<vmem>>, vector<4x256xbf16>
    tpu.vector_store %arg8[%c28_74, %c0_75], %73 {strides = array<i32>} : memref<36x256xbf16, #tpu.memory_space<vmem>>, vector<4x256xbf16>,
    %c0_76 = arith.constant 0 : index
    %c34_77 = arith.constant 34 : index
    %75 = vector.load %arg7[%c0_76, %c34_77] : memref<4x290xbf16, #tpu.memory_space<vmem>>, vector<4x256xbf16>
    %76 = vector.broadcast %7 : vector<1x256xbf16> to vector<4x256xbf16>
    %77 = arith.mulf %75, %76 : vector<4x256xbf16>
    %c32_78 = arith.constant 32 : index
    %c0_79 = arith.constant 0 : index
    %78 = vector.load %arg8[%c32_78, %c0_79] : memref<36x256xbf16, #tpu.memory_space<vmem>>, vector<4x256xbf16>
    tpu.vector_store %arg8[%c32_78, %c0_79], %77 {strides = array<i32>} : memref<36x256xbf16, #tpu.memory_space<vmem>>, vector<4x256xbf16>,
    %c0_80 = arith.constant 0 : index
    %c0_81 = arith.constant 0 : index
    %79 = vector.load %arg3[%c0_80, %c0_81] : memref<4x36xbf16, #tpu.memory_space<vmem>>, vector<4x36xbf16>
    %c0_82 = arith.constant 0 : index
    %c0_83 = arith.constant 0 : index
    %80 = vector.load %arg8[%c0_82, %c0_83] : memref<36x256xbf16, #tpu.memory_space<vmem>>, vector<36x256xbf16>
    %cst_84 = arith.constant dense<0.000000e+00> : vector<4x256xf32>
    %81 = tpu.matmul %79, %80, %cst_84 {dimension_numbers = #tpu.dot_dimension_numbers<[1], [0], [0], [1], [0, 0, 1, 1], [], []>} : vector<4x36xbf16>, vector<36x256xbf16>, vector<4x256xf32> -> vector<4x256xf32>
    %c1_85 = arith.constant 1 : index
    %c0_86 = arith.constant 0 : index
    %c0_87 = arith.constant 0 : index
    %82 = vector.load %arg4[%c1_85, %c0_86, %c0_87] : memref<2x4x1xf32, #tpu.memory_space<vmem>>, vector<1x4x1xf32>
    %83 = vector.shape_cast %82 : vector<1x4x1xf32> to vector<4x1xf32>
    %84 = vector.broadcast %83 : vector<4x1xf32> to vector<4x256xf32>
    %85 = arith.addf %81, %84 : vector<4x256xf32>
    %c0_88 = arith.constant 0 : index
    %c0_89 = arith.constant 0 : index
    %c0_90 = arith.constant 0 : index
    %86 = vector.load %arg1[%c0_88, %c0_89, %c0_90] : memref<1x4x256xbf16, #tpu.memory_space<vmem>>, vector<1x4x256xbf16>
    %87 = vector.shape_cast %86 : vector<1x4x256xbf16> to vector<4x256xbf16>
    %88 = arith.extf %87 : vector<4x256xbf16> to vector<4x256xf32>
    %89 = arith.addf %85, %88 : vector<4x256xf32>
    %cst_91 = arith.constant 0.000000e+00 : f32
    %90 = vector.broadcast %cst_91 : f32 to vector<4x256xf32>
    %91 = arith.maximumf %89, %90 : vector<4x256xf32>
    %c0_92 = arith.constant 0 : index
    %c0_93 = arith.constant 0 : index
    %c0_94 = arith.constant 0 : index
    %92 = vector.load %arg6[%c0_92, %c0_93, %c0_94] : memref<1x4x256xf32, #tpu.memory_space<vmem>>, vector<1x4x256xf32>
    %93 = vector.shape_cast %92 : vector<1x4x256xf32> to vector<4x256xf32>
    %94 = vector.shape_cast %91 : vector<4x256xf32> to vector<1x4x256xf32>
    tpu.vector_store %arg6[%c0_92, %c0_93, %c0_94], %94 {strides = array<i32>} : memref<1x4x256xf32, #tpu.memory_space<vmem>>, vector<1x4x256xf32>,
    return
  }
  func.func @transform_0(%arg0: i32) -> (i32, i32, i32) {
    %c0_i32 = arith.constant 0 : i32
    %c0_i32_0 = arith.constant 0 : i32
    %c0_i32_1 = arith.constant 0 : i32
    return %arg0, %c0_i32, %c0_i32_0 : i32, i32, i32
  }
  func.func @transform_1(%arg0: i32) -> (i32, i32) {
    %c0_i32 = arith.constant 0 : i32
    %c0_i32_0 = arith.constant 0 : i32
    %c0_i32_1 = arith.constant 0 : i32
    return %c0_i32, %c0_i32_0 : i32, i32
  }
  func.func @transform_2(%arg0: i32) -> (i32, i32) {
    %c0_i32 = arith.constant 0 : i32
    %c0_i32_0 = arith.constant 0 : i32
    %c0_i32_1 = arith.constant 0 : i32
    return %c0_i32, %c0_i32_0 : i32, i32
  }
  func.func @transform_3(%arg0: i32) -> (i32, i32, i32) {
    %c0_i32 = arith.constant 0 : i32
    %c0_i32_0 = arith.constant 0 : i32
    %c0_i32_1 = arith.constant 0 : i32
    %c0_i32_2 = arith.constant 0 : i32
    return %c0_i32, %c0_i32_0, %c0_i32_1 : i32, i32, i32
  }
  func.func @transform_4(%arg0: i32) -> (i32, i32) {
    %c0_i32 = arith.constant 0 : i32
    %c0_i32_0 = arith.constant 0 : i32
    %c0_i32_1 = arith.constant 0 : i32
    return %c0_i32, %c0_i32_0 : i32, i32
  }
  func.func @transform_5(%arg0: i32) -> (i32, i32, i32) {
    %c0_i32 = arith.constant 0 : i32
    %c0_i32_0 = arith.constant 0 : i32
    %c0_i32_1 = arith.constant 0 : i32
    return %arg0, %c0_i32, %c0_i32_0 : i32, i32, i32
  }
}

</mosaic_0001>

<llo_original>
// kernel: tpu_custom_call.1
$region0: #{tpu_custom_call.1}
  #allocation0 [shape = 'u32[]', space=smem, size = 0x4, offset = 0x4, fixed_abs, tag = 'smem constant byte address 0x4 - core index']
  #allocation1 [shape = 'u32[144,128]{1,0:T(1,128)}', space=vmem, size = 0x12000, scoped, tag = 'internal scratch']
  #allocation2 [shape = 'bf16[4,290]{1,0:T(4,128)(2,1)}', space=vmem, size = 0xc00, scoped, tag = 'scratch operand']
  #allocation3 [shape = 'bf16[36,256]{1,0:T(8,128)(2,1)}', space=vmem, size = 0x5000, scoped, tag = 'scratch operand']
  %s0 = inlined_call_operand.vmem [shape: bf16[2,4,256], index: 0, kind: input, shape index: {}]
  %s1 = inlined_call_operand.hbm [shape: bf16[4,36], index: 1, kind: input, shape index: {}]
  %s2 = inlined_call_operand.vmem [shape: bf16[4,36], index: 2, kind: input, shape index: {}]
  %s3 = inlined_call_operand.vmem [shape: f32[2,4,1], index: 3, kind: input, shape index: {}]
  %s4 = inlined_call_operand.vmem [shape: bf16[3,256], index: 4, kind: input, shape index: {}]
  %s5 = inlined_call_operand.hbm [shape: f32[2,4,256], index: 5, kind: output, shape index: {}]
  %s6 = sld [smem:[#allocation0]]
  $region57: #{tpu_custom_call.1} parent=0
    _
  %s8 = ssub.s32 1, %s6
  %s9 = scalar_select 0, %s8, %s6
  $region1: #{tpu_custom_call.1} parent=0
    #allocation4 [shape = 'u8[1024]{0}', space=vmem, size = 0x400, scoped, tag = 'input window, operand 1, single buffered']
    #allocation5 [shape = 's32[2]{0}', space=sflag, size = 0x8, scoped, tag = 'scoped memory for tpu_custom_call.1']
    #allocation6 [shape = 's32[2]{0}', space=sflag, size = 0x8, scoped, tag = 'scoped memory for tpu_custom_call.1']
    #allocation7 [shape = 'u8[8192]{0}', space=vmem, size = 0x2000, scoped, tag = 'output window, operand 0']
    %10 = vsyncpa [#allocation5], 0
    %11 = vsyncpa [#allocation6], 0
    %s12 = scalar_lea.sflag [#allocation6], 1
    %13 = vsyncpa %s12, 0
    loop: start=0, step=1, limit=4
    $region2: #{tpu_custom_call.1} parent=1 // loop_pre_header
      _
    $region3: #{tpu_custom_call.1} parent=1 // loop_header
      %s15 = sphi 0, %s19
      %p16 = scmp.ge.s32.totalorder %s15, 4
      %s25 = sphi 0, %s27
      %s28 = sphi 0, %s25
      %s29 = sphi 0, %s28
      %s45 = sphi 0, %s29
      %s49 = sphi 0, %s49
      %s51 = sphi 0, %s49
      %s52 = sphi 0, %s51
      %s66 = sphi 0, %s52
      %s70 = sphi 0, %s70
      %s72 = sphi 0, %s70
      %s73 = sphi 0, %s72
      %s87 = sphi 0, %s73
      %s91 = sphi 0, %s91
      %s93 = sphi 0, %s91
      %s94 = sphi 0, %s93
      %s108 = sphi 0, %s94
      %s112 = sphi 0, %s112
      %s114 = sphi 0, %s112
      %s115 = sphi 0, %s114
      %s129 = sphi 0, %s115
      %s135 = sphi 0, %s137
      %s138 = sphi 0, %s135
      %s139 = sphi 0, %s138
      %s155 = sphi 0, %s139
    $region4: #{tpu_custom_call.1} parent=1 // loop_header_branch
      %18 = sbr.rel (%p16) target = $region8
    $region5: #{tpu_custom_call.1} parent=1 // loop_body
      %s20 = ssub.s32 %s15, 1
      %s21 = ssub.s32 %s15, 2
      %s22 = sadd.s32 %s15, 1
      %s23 = ssub.s32 %s15, %s22
      %p24 = scmp.eq.s32.totalorder %s23, 0
      %s26 = sadd.s32 %s25, 1
      %s27 = scalar_select %p24, %s25, %s26
      %p30 = pneg %p24
      %p31 = scmp.eq.s32.totalorder %s15, 1
      %p32 = por %p30, %p31
      %p33 = scmp.ne.s32.totalorder %s25, %s28
      %p34 = scmp.eq.s32.totalorder %s15, 0
      %p35 = por %p33, %p34
      %p36 = scmp.ne.s32.totalorder %s25, %s28
      %p37 = scmp.eq.s32.totalorder %s20, 1
      %p38 = por %p36, %p37
      %p39 = scmp.ne.s32.totalorder %s28, %s29
      %p40 = scmp.eq.s32.totalorder %s20, 0
      %p41 = por %p39, %p40
      %p42 = scmp.ne.s32.totalorder %s28, %s29
      %p43 = scmp.eq.s32.totalorder %s21, 1
      %p44 = por %p42, %p43
      %p46 = scmp.ne.s32.totalorder %s29, %s45
      %p47 = scmp.eq.s32.totalorder %s21, 0
      %p48 = por %p46, %p47
      %s50 = sadd.s32 %s49, 1
      %p53 = scmp.eq.s32.totalorder %s15, 1
      %p54 = scmp.ne.s32.totalorder %s49, %s51
      %p55 = scmp.eq.s32.totalorder %s15, 0
      %p56 = por %p54, %p55
      %p57 = scmp.ne.s32.totalorder %s49, %s51
      %p58 = scmp.eq.s32.totalorder %s20, 1
      %p59 = por %p57, %p58
      %p60 = scmp.ne.s32.totalorder %s51, %s52
      %p61 = scmp.eq.s32.totalorder %s20, 0
      %p62 = por %p60, %p61
      %p63 = scmp.ne.s32.totalorder %s51, %s52
      %p64 = scmp.eq.s32.totalorder %s21, 1
      %p65 = por %p63, %p64
      %p67 = scmp.ne.s32.totalorder %s52, %s66
      %p68 = scmp.eq.s32.totalorder %s21, 0
      %p69 = por %p67, %p68
      %s71 = sadd.s32 %s70, 1
      %p74 = scmp.eq.s32.totalorder %s15, 1
      %p75 = scmp.ne.s32.totalorder %s70, %s72
      %p76 = scmp.eq.s32.totalorder %s15, 0
      %p77 = por %p75, %p76
      %p78 = scmp.ne.s32.totalorder %s70, %s72
      %p79 = scmp.eq.s32.totalorder %s20, 1
      %p80 = por %p78, %p79
      %p81 = scmp.ne.s32.totalorder %s72, %s73
      %p82 = scmp.eq.s32.totalorder %s20, 0
      %p83 = por %p81, %p82
      %p84 = scmp.ne.s32.totalorder %s72, %s73
      %p85 = scmp.eq.s32.totalorder %s21, 1
      %p86 = por %p84, %p85
      %p88 = scmp.ne.s32.totalorder %s73, %s87
      %p89 = scmp.eq.s32.totalorder %s21, 0
      %p90 = por %p88, %p89
      %s92 = sadd.s32 %s91, 1
      %p95 = scmp.eq.s32.totalorder %s15, 1
      %p96 = scmp.ne.s32.totalorder %s91, %s93
      %p97 = scmp.eq.s32.totalorder %s15, 0
      %p98 = por %p96, %p97
      %p99 = scmp.ne.s32.totalorder %s91, %s93
      %p100 = scmp.eq.s32.totalorder %s20, 1
      %p101 = por %p99, %p100
      %p102 = scmp.ne.s32.totalorder %s93, %s94
      %p103 = scmp.eq.s32.totalorder %s20, 0
      %p104 = por %p102, %p103
      %p105 = scmp.ne.s32.totalorder %s93, %s94
      %p106 = scmp.eq.s32.totalorder %s21, 1
      %p107 = por %p105, %p106
      %p109 = scmp.ne.s32.totalorder %s94, %s108
      %p110 = scmp.eq.s32.totalorder %s21, 0
      %p111 = por %p109, %p110
      %s113 = sadd.s32 %s112, 1
      %p116 = scmp.eq.s32.totalorder %s15, 1
      %p117 = scmp.ne.s32.totalorder %s112, %s114
      %p118 = scmp.eq.s32.totalorder %s15, 0
      %p119 = por %p117, %p118
      %p120 = scmp.ne.s32.totalorder %s112, %s114
      %p121 = scmp.eq.s32.totalorder %s20, 1
      %p122 = por %p120, %p121
      %p123 = scmp.ne.s32.totalorder %s114, %s115
      %p124 = scmp.eq.s32.totalorder %s20, 0
      %p125 = por %p123, %p124
      %p126 = scmp.ne.s32.totalorder %s114, %s115
      %p127 = scmp.eq.s32.totalorder %s21, 1
      %p128 = por %p126, %p127
      %p130 = scmp.ne.s32.totalorder %s115, %s129
      %p131 = scmp.eq.s32.totalorder %s21, 0
      %p132 = por %p130, %p131
      %s133 = ssub.s32 %s15, %s22
      %p134 = scmp.eq.s32.totalorder %s133, 0
      %s136 = sadd.s32 %s135, 1
      %s137 = scalar_select %p134, %s135, %s136
      %p140 = pneg %p134
      %p141 = scmp.eq.s32.totalorder %s15, 1
      %p142 = por %p140, %p141
      %p143 = scmp.ne.s32.totalorder %s135, %s138
      %p144 = scmp.eq.s32.totalorder %s15, 0
      %p145 = por %p143, %p144
      %p146 = scmp.ne.s32.totalorder %s135, %s138
      %p147 = scmp.eq.s32.totalorder %s20, 1
      %p148 = por %p146, %p147
      %p149 = scmp.ne.s32.totalorder %s138, %s139
      %p150 = scmp.eq.s32.totalorder %s20, 0
      %p151 = por %p149, %p150
      %p152 = scmp.ne.s32.totalorder %s138, %s139
      %p153 = scmp.eq.s32.totalorder %s21, 1
      %p154 = por %p152, %p153
      %p156 = scmp.ne.s32.totalorder %s139, %s155
      %p157 = scmp.eq.s32.totalorder %s21, 0
      %p158 = por %p156, %p157
      %p159 = scmp.le.s32.totalorder 1, %s15
      %p160 = scmp.lt.s32.totalorder %s15, 3
      %p161 = pnand %p159, %p160
      %p162 = pneg %p161
      // Predicated region
      $region9: #{tpu_custom_call.1} parent=5 // pred_check
        _
      $region10: #{tpu_custom_call.1} parent=5 // pred_check_branch
        %164 = sbr.rel (%p161) target = $region12
      $region11: #{tpu_custom_call.1} parent=5 // pred_region
        %s165 = ssub.s32 %s15, 1
        // Predicated region
        $region13: #{tpu_custom_call.1} parent=11 // pred_check
          %p166 = pneg %p62
        $region14: #{tpu_custom_call.1} parent=11 // pred_check_branch
          %168 = sbr.rel (%p166) target = $region16
        $region15: #{tpu_custom_call.1} parent=11 // pred_region
          %s170 = ssub.s32 32, 32
          %171 = vsyncadd [#allocation5], %s170
          %s173 = sshll.u32 [#allocation4], 4
          %s174 = int_to_ptr.vmem [resolvable:$true] %s173
          %176 = dma.hbm_to_vmem [thread:$0]  %s1, 32, %s174, [#allocation5]
        $region16: #{tpu_custom_call.1} parent=11 // pred_fallthru
          _
        // Predicated region
        $region17: #{tpu_custom_call.1} parent=11 // pred_check
          %p177 = pneg %p83
        $region18: #{tpu_custom_call.1} parent=11 // pred_check_branch
          %179 = sbr.rel (%p177) target = $region20
        $region19: #{tpu_custom_call.1} parent=11 // pred_region
          _
        $region20: #{tpu_custom_call.1} parent=11 // pred_fallthru
          _
        // Predicated region
        $region21: #{tpu_custom_call.1} parent=11 // pred_check
          %p180 = pneg %p104
        $region22: #{tpu_custom_call.1} parent=11 // pred_check_branch
          %182 = sbr.rel (%p180) target = $region24
        $region23: #{tpu_custom_call.1} parent=11 // pred_region
          _
        $region24: #{tpu_custom_call.1} parent=11 // pred_fallthru
          _
        // Predicated region
        $region25: #{tpu_custom_call.1} parent=11 // pred_check
          %p183 = pneg %p125
        $region26: #{tpu_custom_call.1} parent=11 // pred_check_branch
          %185 = sbr.rel (%p183) target = $region28
        $region27: #{tpu_custom_call.1} parent=11 // pred_region
          _
        $region28: #{tpu_custom_call.1} parent=11 // pred_fallthru
          _
      $region12: #{tpu_custom_call.1} parent=5 // pred_fallthru
        _
      %p186 = scmp.lt.s32.totalorder %s15, 2
      // Predicated region
      $region29: #{tpu_custom_call.1} parent=5 // pred_check
        %p187 = pneg %p186
      $region30: #{tpu_custom_call.1} parent=5 // pred_check_branch
        %189 = sbr.rel (%p187) target = $region32
      $region31: #{tpu_custom_call.1} parent=5 // pred_region
        // Predicated region
        $region33: #{tpu_custom_call.1} parent=31 // pred_check
          %p190 = pneg %p35
        $region34: #{tpu_custom_call.1} parent=31 // pred_check_branch
          %192 = sbr.rel (%p190) target = $region36
        $region35: #{tpu_custom_call.1} parent=31 // pred_region
          %p193 = scmp.lt.s32.totalorder %s15, 1
          %s194 = scalar_select %p193, %s15, 1
          %s195 = smul.addr %s194, 2
          %s196 = smul.addr %s195, 2
          %s197 = scalar_lea.vmem %s0, %s196
        $region36: #{tpu_custom_call.1} parent=31 // pred_fallthru
          _
      $region32: #{tpu_custom_call.1} parent=5 // pred_fallthru
        _
      %p198 = scmp.le.s32.totalorder 1, %s15
      %p199 = scmp.lt.s32.totalorder %s15, 3
      %p200 = pnand %p198, %p199
      %p201 = pneg %p200
      // Predicated region
      $region37: #{tpu_custom_call.1} parent=5 // pred_check
        _
      $region38: #{tpu_custom_call.1} parent=5 // pred_check_branch
        %203 = sbr.rel (%p200) target = $region40
      $region39: #{tpu_custom_call.1} parent=5 // pred_region
        %s204 = ssub.s32 %s15, 1
        // Predicated region
        $region41: #{tpu_custom_call.1} parent=39 // pred_check
          %p205 = pneg %p62
        $region42: #{tpu_custom_call.1} parent=39 // pred_check_branch
          %207 = sbr.rel (%p205) target = $region44
        $region43: #{tpu_custom_call.1} parent=39 // pred_region
          %208 = dma.done [#allocation5], 32
        $region44: #{tpu_custom_call.1} parent=39 // pred_fallthru
          _
        %p209 = scmp.lt.s32.totalorder %s20, 1
        %s210 = scalar_select %p209, %s20, 1
        %s211 = smul.addr %s210, 2
        %s212 = smul.addr %s211, 2
        %s213 = scalar_lea.vmem %s0, %s212
        %p214 = pneg %p41
        %p215 = pneg %p38
        %p216 = pneg %p62
        %p217 = pneg %p59
        %p218 = pneg %p83
        %p219 = pneg %p80
        %p220 = pneg %p104
        %p221 = pneg %p101
        %p222 = pneg %p125
        %p223 = pneg %p122
        %p224 = pneg %p151
        %p225 = pneg %p148
        %s226 = sand.u32 %s138, 1
        %s227 = scalar_lea.sflag [#allocation6], %s226
        %s228 = sand.u32 %s138, 1
        %s229 = smul.addr %s228, 8
        %s230 = scalar_lea.vmem [#allocation7], %s229
        %p231 = scmp.lt.s32.totalorder %s20, 1
        %s232 = scalar_select %p231, %s20, 1
        %s233 = smul.addr %s232, 2
        %s234 = smul.addr %s233, 2
        %s235 = scalar_lea.vmem %s0, %s234
        %vm237 = vcmask 132096
        %238 = vst.msk [vmem:[#allocation2] sm:$0x3] %vm237, 0
        %vm239 = vcmask 271496
        %240 = vst.msk [vmem:[#allocation2 + $0x4] sm:$0x3] %vm239, 0
        %v241 = vld [vmem:[%s235] sm:$0xf]
        %243 = vrot.lane.b32.xlu0 %v241, 17
        %v244 = vpop.permute.xlu0 %243
        %v245 = vrot.slane %v244, 6
        %vm246 = vcmask 138240
        %v247 = vsel %vm246, %v245, %v244
        %vm249 = vcmask 1041544
        %vm250 = vcmask 1043458
        %vm251 = vmor %vm250, %vm249
        %vm252 = vcmask 136196
        %vm253 = vmor %vm252, %vm251
        %254 = vst.msk [vmem:[#allocation2] sm:$0x3f] %vm253, %v247
        %v255 = vld [vmem:[%s4] sm:$0x5]
        %v256 = vld [vmem:[#allocation2] sm:$0xf]
        %v259 = vunpack.c.l.s4 1983009808
        %v260 = vunpack.c.0.s8 %v259
        %v261 = vlaneseq
        %v262 = vshrl.u32 %v261, 7
        %v263 = vsub.s32 %v260, %v262
        %v264 = vrot.slane %v255, %v263
        %v265 = vcombine.high %v264, %v264
        %v267 = vpack.i.b16 %v264, %v264
        %v269 = vlaneseq
        %v270 = vshrl.u32 %v269, 7
        %v271 = vsub.s32 0, %v270
        %v272 = vrot.slane %v267, %v271
        %v274 = vpack.i.b16 %v265, %v265
        %v276 = vlaneseq
        %v277 = vshrl.u32 %v276, 7
        %v278 = vsub.s32 0, %v277
        %v279 = vrot.slane %v274, %v278
        %v282 = vcombine.low %v272, %v279
        %v284 = vunpack.c.l.s4 1983009808
        %v285 = vunpack.c.0.s8 %v284
        %v286 = vlaneseq
        %v287 = vshrl.u32 %v286, 7
        %v288 = vsub.s32 %v285, %v287
        %v289 = vrot.slane %v282, %v288
        %v291 = vmul.bf16 %v256, %v289
        %v294 = vunpack.c.l.s4 1983009808
        %v295 = vunpack.c.0.s8 %v294
        %v296 = vlaneseq
        %v297 = vshrl.u32 %v296, 7
        %v298 = vsub.s32 %v295, %v297
        %v299 = vrot.slane %v291, %v298
        %301 = vst [vmem:[#allocation3] sm:$0x33] %v299
        %v302 = vld [vmem:[#allocation2] sm:$0x3f]
        %v304 = vcombine.low %v302, %v302
        %v306 = vunpack.c.l.s4 1983009808
        %v307 = vunpack.c.0.s8 %v306
        %v308 = vlaneseq
        %v309 = vshrl.u32 %v308, 7
        %v310 = vsub.s32 %v307, %v309
        %v311 = vrot.slane %v304, %v310
        %v313 = vunpack.c.l.s4 1983009808
        %v314 = vunpack.c.0.s8 %v313
        %v315 = vlaneseq
        %v316 = vshrl.u32 %v315, 7
        %v317 = vsub.s32 %v314, %v316
        %v318 = vrot.slane %v302, %v317
        %319 = vrot.lane.b32.xlu0 %v311, 127
        %v320 = vpop.permute.xlu0 %319
        %321 = vrot.lane.b32.xlu0 %v318, 127
        %v322 = vpop.permute.xlu0 %321
        %v323 = vrot.slane %v320, 4
        %v324 = vrot.slane %v322, 4
        %vm325 = vcmask 1043456
        %v326 = vsel %vm325, %v323, %v324
        %vm327 = vcmask 1039360
        %v328 = vsel %vm327, %v320, %v326
        %330 = vst [vmem:[#allocation3] sm:$0xcc] %v328
        %v331 = vld [vmem:[#allocation2] sm:$0x3f]
        %v332 = vshrl.u32 %v264, 16
        %v333 = vpack.i.b16 %v332, %v332
        %v335 = vlaneseq
        %v336 = vshrl.u32 %v335, 7
        %v337 = vsub.s32 0, %v336
        %v338 = vrot.slane %v333, %v337
        %v339 = vshrl.u32 %v265, 16
        %v340 = vpack.i.b16 %v339, %v339
        %v342 = vlaneseq
        %v343 = vshrl.u32 %v342, 7
        %v344 = vsub.s32 0, %v343
        %v345 = vrot.slane %v340, %v344
        %v348 = vcombine.low %v338, %v345
        %v350 = vunpack.c.l.s4 1983009808
        %v351 = vunpack.c.0.s8 %v350
        %v352 = vlaneseq
        %v353 = vshrl.u32 %v352, 7
        %v354 = vsub.s32 %v351, %v353
        %v355 = vrot.slane %v348, %v354
        %356 = vrot.lane.b32.xlu0 %v355, 2
        %v357 = vpop.permute.xlu0 %356
        %v358 = vrot.slane %v357, 6
        %vm359 = vcmask 15360
        %v360 = vsel %vm359, %v358, %v357
        %v362 = vmul.bf16 %v331, %v360
        %v364 = vcombine.high %v362, %v362
        %v366 = vunpack.c.l.s4 1983009808
        %v367 = vunpack.c.0.s8 %v366
        %v368 = vlaneseq
        %v369 = vshrl.u32 %v368, 7
        %v370 = vsub.s32 %v367, %v369
        %v371 = vrot.slane %v362, %v370
        %v373 = vunpack.c.l.s4 1983009808
        %v374 = vunpack.c.0.s8 %v373
        %v375 = vlaneseq
        %v376 = vshrl.u32 %v375, 7
        %v377 = vsub.s32 %v374, %v376
        %v378 = vrot.slane %v364, %v377
        %379 = vrot.lane.b32.xlu0 %v371, 126
        %v380 = vpop.permute.xlu0 %379
        %381 = vrot.lane.b32.xlu0 %v378, 126
        %v382 = vpop.permute.xlu0 %381
        %v383 = vrot.slane %v380, 4
        %v384 = vrot.slane %v382, 4
        %v385 = vsel %vm325, %v383, %v384
        %vm386 = vcmask 1031168
        %v387 = vsel %vm386, %v380, %v385
        %389 = vst [vmem:[#allocation3 + $0x8] sm:$0x33] %v387
        %v390 = vld [vmem:[#allocation2] sm:$0x3f]
        %391 = vrot.lane.b32.xlu0 %v289, 16
        %v392 = vpop.permute.xlu0 %391
        %v393 = vrot.slane %v392, 6
        %vm394 = vcmask 130048
        %v395 = vsel %vm394, %v393, %v392
        %v397 = vmul.bf16 %v390, %v395
        %v399 = vcombine.low %v397, %v397
        %v401 = vunpack.c.l.s4 1983009808
        %v402 = vunpack.c.0.s8 %v401
        %v403 = vlaneseq
        %v404 = vshrl.u32 %v403, 7
        %v405 = vsub.s32 %v402, %v404
        %v406 = vrot.slane %v399, %v405
        %v408 = vunpack.c.l.s4 1983009808
        %v409 = vunpack.c.0.s8 %v408
        %v410 = vlaneseq
        %v411 = vshrl.u32 %v410, 7
        %v412 = vsub.s32 %v409, %v411
        %v413 = vrot.slane %v397, %v412
        %414 = vrot.lane.b32.xlu0 %v406, 112
        %v415 = vpop.permute.xlu0 %414
        %416 = vrot.lane.b32.xlu0 %v413, 112
        %v417 = vpop.permute.xlu0 %416
        %v418 = vrot.slane %v415, 4
        %v419 = vrot.slane %v417, 4
        %v420 = vsel %vm325, %v418, %v419
        %vm421 = vcmask 916480
        %v422 = vsel %vm421, %v415, %v420
        %424 = vst [vmem:[#allocation3 + $0x8] sm:$0xcc] %v422
        %v425 = vld [vmem:[#allocation2] sm:$0x3f]
        %v427 = vcombine.high %v425, %v425
        %v429 = vunpack.c.l.s4 1983009808
        %v430 = vunpack.c.0.s8 %v429
        %v431 = vlaneseq
        %v432 = vshrl.u32 %v431, 7
        %v433 = vsub.s32 %v430, %v432
        %v434 = vrot.slane %v425, %v433
        %v436 = vunpack.c.l.s4 1983009808
        %v437 = vunpack.c.0.s8 %v436
        %v438 = vlaneseq
        %v439 = vshrl.u32 %v438, 7
        %v440 = vsub.s32 %v437, %v439
        %v441 = vrot.slane %v427, %v440
        %442 = vrot.lane.b32.xlu0 %v434, 111
        %v443 = vpop.permute.xlu0 %442
        %444 = vrot.lane.b32.xlu0 %v441, 111
        %v445 = vpop.permute.xlu0 %444
        %v446 = vrot.slane %v443, 4
        %v447 = vrot.slane %v445, 4
        %v448 = vsel %vm325, %v446, %v447
        %vm449 = vcmask 908288
        %v450 = vsel %vm449, %v443, %v448
        %452 = vst [vmem:[#allocation3 + $0x10] sm:$0x33] %v450
        %v453 = vld [vmem:[#allocation2] sm:$0x3f]
        %454 = vrot.lane.b32.xlu0 %v355, 18
        %v455 = vpop.permute.xlu0 %454
        %v456 = vrot.slane %v455, 6
        %vm457 = vcmask 146432
        %v458 = vsel %vm457, %v456, %v455
        %v460 = vmul.bf16 %v453, %v458
        %v462 = vcombine.low %v460, %v460
        %v464 = vunpack.c.l.s4 1983009808
        %v465 = vunpack.c.0.s8 %v464
        %v466 = vlaneseq
        %v467 = vshrl.u32 %v466, 7
        %v468 = vsub.s32 %v465, %v467
        %v469 = vrot.slane %v462, %v468
        %v471 = vunpack.c.l.s4 1983009808
        %v472 = vunpack.c.0.s8 %v471
        %v473 = vlaneseq
        %v474 = vshrl.u32 %v473, 7
        %v475 = vsub.s32 %v472, %v474
        %v476 = vrot.slane %v460, %v475
        %477 = vrot.lane.b32.xlu0 %v469, 110
        %v478 = vpop.permute.xlu0 %477
        %479 = vrot.lane.b32.xlu0 %v476, 110
        %v480 = vpop.permute.xlu0 %479
        %v481 = vrot.slane %v478, 4
        %v482 = vrot.slane %v480, 4
        %v483 = vsel %vm325, %v481, %v482
        %vm484 = vcmask 900096
        %v485 = vsel %vm484, %v478, %v483
        %487 = vst [vmem:[#allocation3 + $0x10] sm:$0xcc] %v485
        %v488 = vld [vmem:[#allocation2] sm:$0x3f]
        %489 = vrot.lane.b32.xlu0 %v289, 32
        %v490 = vpop.permute.xlu0 %489
        %v491 = vrot.slane %v490, 6
        %vm492 = vcmask 261120
        %v493 = vsel %vm492, %v491, %v490
        %v495 = vmul.bf16 %v488, %v493
        %v497 = vcombine.high %v495, %v495
        %v499 = vunpack.c.l.s4 1983009808
        %v500 = vunpack.c.0.s8 %v499
        %v501 = vlaneseq
        %v502 = vshrl.u32 %v501, 7
        %v503 = vsub.s32 %v500, %v502
        %v504 = vrot.slane %v495, %v503
        %v506 = vunpack.c.l.s4 1983009808
        %v507 = vunpack.c.0.s8 %v506
        %v508 = vlaneseq
        %v509 = vshrl.u32 %v508, 7
        %v510 = vsub.s32 %v507, %v509
        %v511 = vrot.slane %v497, %v510
        %512 = vrot.lane.b32.xlu0 %v504, 96
        %v513 = vpop.permute.xlu0 %512
        %514 = vrot.lane.b32.xlu0 %v511, 96
        %v515 = vpop.permute.xlu0 %514
        %v516 = vrot.slane %v513, 4
        %v517 = vrot.slane %v515, 4
        %v518 = vsel %vm325, %v516, %v517
        %vm519 = vcmask 785408
        %v520 = vsel %vm519, %v513, %v518
        %522 = vst [vmem:[#allocation3 + $0x18] sm:$0x33] %v520
        %v523 = vld [vmem:[#allocation2] sm:$0x3f]
        %v525 = vcombine.low %v523, %v523
        %v527 = vunpack.c.l.s4 1983009808
        %v528 = vunpack.c.0.s8 %v527
        %v529 = vlaneseq
        %v530 = vshrl.u32 %v529, 7
        %v531 = vsub.s32 %v528, %v530
        %v532 = vrot.slane %v525, %v531
        %v534 = vunpack.c.l.s4 1983009808
        %v535 = vunpack.c.0.s8 %v534
        %v536 = vlaneseq
        %v537 = vshrl.u32 %v536, 7
        %v538 = vsub.s32 %v535, %v537
        %v539 = vrot.slane %v523, %v538
        %540 = vrot.lane.b32.xlu0 %v532, 95
        %v541 = vpop.permute.xlu0 %540
        %542 = vrot.lane.b32.xlu0 %v539, 95
        %v543 = vpop.permute.xlu0 %542
        %v544 = vrot.slane %v541, 4
        %v545 = vrot.slane %v543, 4
        %v546 = vsel %vm325, %v544, %v545
        %vm547 = vcmask 777216
        %v548 = vsel %vm547, %v541, %v546
        %550 = vst [vmem:[#allocation3 + $0x18] sm:$0xcc] %v548
        %v551 = vld [vmem:[#allocation2] sm:$0x3f]
        %552 = vrot.lane.b32.xlu0 %v355, 34
        %v553 = vpop.permute.xlu0 %552
        %v554 = vrot.slane %v553, 6
        %vm555 = vcmask 277504
        %v556 = vsel %vm555, %v554, %v553
        %v558 = vmul.bf16 %v551, %v556
        %v560 = vcombine.high %v558, %v558
        %v562 = vunpack.c.l.s4 1983009808
        %v563 = vunpack.c.0.s8 %v562
        %v564 = vlaneseq
        %v565 = vshrl.u32 %v564, 7
        %v566 = vsub.s32 %v563, %v565
        %v567 = vrot.slane %v558, %v566
        %v569 = vunpack.c.l.s4 1983009808
        %v570 = vunpack.c.0.s8 %v569
        %v571 = vlaneseq
        %v572 = vshrl.u32 %v571, 7
        %v573 = vsub.s32 %v570, %v572
        %v574 = vrot.slane %v560, %v573
        %575 = vrot.lane.b32.xlu0 %v567, 94
        %v576 = vpop.permute.xlu0 %575
        %577 = vrot.lane.b32.xlu0 %v574, 94
        %v578 = vpop.permute.xlu0 %577
        %v579 = vrot.slane %v576, 4
        %v580 = vrot.slane %v578, 4
        %v581 = vsel %vm325, %v579, %v580
        %vm582 = vcmask 769024
        %v583 = vsel %vm582, %v576, %v581
        %585 = vst [vmem:[#allocation3 + $0x20] sm:$0x33] %v583
        %v586 = vld [vmem:[#allocation4] sm:$0x3]
        %v587 = vld [vmem:[#allocation3] sm:$0xff]
        %v588 = vld [vmem:[#allocation3 + $0x8] sm:$0xff]
        %v589 = vld [vmem:[#allocation3 + $0x10] sm:$0xff]
        %v590 = vld [vmem:[#allocation3 + $0x18] sm:$0xff]
        %v591 = vld [vmem:[#allocation3 + $0x20] sm:$0x33]
        %v592 = vld [vmem:[%s3] sm:$0xf]
        %594 = vset.pattern.permute.xlu0 0
        %595 = vperm.xlu0 %594, %v592
        %v596 = vpop.permute.xlu0 %595
        %v603 = vunpack.c.l.b16 %v587
        %v604 = vunpack.c.h.b16 %v587
        %v605 = vunpack.c.l.b16 %v588
        %v606 = vunpack.c.h.b16 %v588
        %v607 = vunpack.c.l.b16 %v589
        %v608 = vunpack.c.h.b16 %v589
        %v609 = vunpack.c.l.b16 %v590
        %v610 = vunpack.c.h.b16 %v590
        %v611 = vunpack.c.l.b16 %v591
        %v612 = vunpack.c.h.b16 %v591
        %v613 = vpack.c.b16 %v605, %v603
        %v614 = vpack.c.b16 %v606, %v604
        %v615 = vpack.c.b16 %v609, %v607
        %v616 = vpack.c.b16 %v610, %v608
        %v617 = vpack.c.b16 %v611, %v611
        %v618 = vpack.c.b16 %v612, %v612
        %vm623 = vcmask 293888
        %v625 = vsel %vm623, %v586, 0
        %vm627 = vcmask 1041408
        %v629 = vsel %vm627, %v617, 0
        %v632 = vsel %vm627, %v618, 0
        %634 = vmatprep.subr.bf16.mxu0 %v614
        %635 = vmatpush1.bf16.msra.mxu0 %v613
        %636 = vmatprep.subr.bf16.mxu0 %v616
        %637 = vmatpush1.bf16.msra.mxu0 %v615
        %638 = vmatprep.subr.bf16.mxu0 %v632
        %639 = vmatpush1.bf16.msra.mxu0 %v629
        %640 = vmatprep.subr.bf16.mxu0 0
        %641 = vmatpush1.bf16.msra.mxu0 0
        %642 = vmatprep.subr.bf16.mxu0 0
        %643 = vmatpush1.bf16.msra.mxu0 0
        %644 = vmatprep.subr.bf16.mxu0 0
        %645 = vmatpush1.bf16.msra.mxu0 0
        %646 = vmatprep.subr.bf16.mxu0 0
        %647 = vmatpush1.bf16.msra.mxu0 0
        %648 = vmatprep.subr.bf16.mxu0 0
        %649 = vmatpush1.bf16.msra.mxu0 0
        %650 = vmatprep.subr.bf16.mxu0 0
        %651 = vmatpush1.bf16.msra.mxu0 0
        %652 = vmatprep.subr.bf16.mxu0 0
        %653 = vmatpush1.bf16.msra.mxu0 0
        %654 = vmatprep.subr.bf16.mxu0 0
        %655 = vmatpush1.bf16.msra.mxu0 0
        %656 = vmatprep.subr.bf16.mxu0 0
        %657 = vmatpush1.bf16.msra.mxu0 0
        %658 = vmatprep.subr.bf16.mxu0 0
        %659 = vmatpush1.bf16.msra.mxu0 0
        %660 = vmatprep.subr.bf16.mxu0 0
        %661 = vmatpush1.bf16.msra.mxu0 0
        %662 = vmatprep.subr.bf16.mxu0 0
        %663 = vmatpush1.bf16.msra.mxu0 0
        %664 = vmatprep.subr.bf16.mxu0 0
        %665 = vmatpush1.bf16.msra.mxu0 0
        %666 = vmatprep.mubr.bf16.mxu0 0
        %667 = vmatmul.mubr.bf16.gmra.mrb[0].mxu0 %v625
        %v668 = vpop.f32.mrb[0].mxu0
        %v669 = vadd.f32 %v596, %v668
        %v670 = vpop.f32.mrb[0].mxu0
        %v671 = vadd.f32 %v596, %v670
        %v672 = vpop.f32.mrb[0].mxu0
        %v673 = vpop.f32.mrb[0].mxu0
        %674 = vdwg.mxu0
        %v675 = vmax.f32 %v669, 0.0
        %v676 = vmax.f32 %v671, 0.0
        %v677 = vpack.c.bf16 %v675, %v675
        %v678 = vpack.c.bf16 %v676, %v676
        %v681 = vcombine.low %v677, %v678
        %v683 = vunpack.c.l.s4 1983009808
        %v684 = vunpack.c.0.s8 %v683
        %v685 = vlaneseq
        %v686 = vshrl.u32 %v685, 7
        %v687 = vsub.s32 %v684, %v686
        %v688 = vrot.slane %v681, %v687
        %689 = vrot.lane.b32.xlu0 %v688, 17
        %v690 = vpop.permute.xlu0 %689
        %v691 = vrot.slane %v690, 6
        %v692 = vsel %vm246, %v691, %v690
        %694 = vst.msk [vmem:[#allocation2] sm:$0x3f] %vm253, %v692
        %v695 = vld [vmem:[#allocation2] sm:$0xf]
        %v696 = vmul.bf16 %v695, %v289
        %v699 = vunpack.c.l.s4 1983009808
        %v700 = vunpack.c.0.s8 %v699
        %v701 = vlaneseq
        %v702 = vshrl.u32 %v701, 7
        %v703 = vsub.s32 %v700, %v702
        %v704 = vrot.slane %v696, %v703
        %706 = vst [vmem:[#allocation3] sm:$0x33] %v704
        %v707 = vld [vmem:[#allocation2] sm:$0x3f]
        %v709 = vcombine.low %v707, %v707
        %v711 = vunpack.c.l.s4 1983009808
        %v712 = vunpack.c.0.s8 %v711
        %v713 = vlaneseq
        %v714 = vshrl.u32 %v713, 7
        %v715 = vsub.s32 %v712, %v714
        %v716 = vrot.slane %v709, %v715
        %v718 = vunpack.c.l.s4 1983009808
        %v719 = vunpack.c.0.s8 %v718
        %v720 = vlaneseq
        %v721 = vshrl.u32 %v720, 7
        %v722 = vsub.s32 %v719, %v721
        %v723 = vrot.slane %v707, %v722
        %724 = vrot.lane.b32.xlu0 %v716, 127
        %v725 = vpop.permute.xlu0 %724
        %726 = vrot.lane.b32.xlu0 %v723, 127
        %v727 = vpop.permute.xlu0 %726
        %v728 = vrot.slane %v725, 4
        %v729 = vrot.slane %v727, 4
        %v730 = vsel %vm325, %v728, %v729
        %v731 = vsel %vm327, %v725, %v730
        %733 = vst [vmem:[#allocation3] sm:$0xcc] %v731
        %v734 = vld [vmem:[#allocation2] sm:$0x3f]
        %v735 = vmul.bf16 %v734, %v360
        %v737 = vcombine.high %v735, %v735
        %v739 = vunpack.c.l.s4 1983009808
        %v740 = vunpack.c.0.s8 %v739
        %v741 = vlaneseq
        %v742 = vshrl.u32 %v741, 7
        %v743 = vsub.s32 %v740, %v742
        %v744 = vrot.slane %v735, %v743
        %v746 = vunpack.c.l.s4 1983009808
        %v747 = vunpack.c.0.s8 %v746
        %v748 = vlaneseq
        %v749 = vshrl.u32 %v748, 7
        %v750 = vsub.s32 %v747, %v749
        %v751 = vrot.slane %v737, %v750
        %752 = vrot.lane.b32.xlu0 %v744, 126
        %v753 = vpop.permute.xlu0 %752
        %754 = vrot.lane.b32.xlu0 %v751, 126
        %v755 = vpop.permute.xlu0 %754
        %v756 = vrot.slane %v753, 4
        %v757 = vrot.slane %v755, 4
        %v758 = vsel %vm325, %v756, %v757
        %v759 = vsel %vm386, %v753, %v758
        %761 = vst [vmem:[#allocation3 + $0x8] sm:$0x33] %v759
        %v762 = vld [vmem:[#allocation2] sm:$0x3f]
        %v763 = vmul.bf16 %v762, %v395
        %v765 = vcombine.low %v763, %v763
        %v767 = vunpack.c.l.s4 1983009808
        %v768 = vunpack.c.0.s8 %v767
        %v769 = vlaneseq
        %v770 = vshrl.u32 %v769, 7
        %v771 = vsub.s32 %v768, %v770
        %v772 = vrot.slane %v765, %v771
        %v774 = vunpack.c.l.s4 1983009808
        %v775 = vunpack.c.0.s8 %v774
        %v776 = vlaneseq
        %v777 = vshrl.u32 %v776, 7
        %v778 = vsub.s32 %v775, %v777
        %v779 = vrot.slane %v763, %v778
        %780 = vrot.lane.b32.xlu0 %v772, 112
        %v781 = vpop.permute.xlu0 %780
        %782 = vrot.lane.b32.xlu0 %v779, 112
        %v783 = vpop.permute.xlu0 %782
        %v784 = vrot.slane %v781, 4
        %v785 = vrot.slane %v783, 4
        %v786 = vsel %vm325, %v784, %v785
        %v787 = vsel %vm421, %v781, %v786
        %789 = vst [vmem:[#allocation3 + $0x8] sm:$0xcc] %v787
        %v790 = vld [vmem:[#allocation2] sm:$0x3f]
        %v792 = vcombine.high %v790, %v790
        %v794 = vunpack.c.l.s4 1983009808
        %v795 = vunpack.c.0.s8 %v794
        %v796 = vlaneseq
        %v797 = vshrl.u32 %v796, 7
        %v798 = vsub.s32 %v795, %v797
        %v799 = vrot.slane %v790, %v798
        %v801 = vunpack.c.l.s4 1983009808
        %v802 = vunpack.c.0.s8 %v801
        %v803 = vlaneseq
        %v804 = vshrl.u32 %v803, 7
        %v805 = vsub.s32 %v802, %v804
        %v806 = vrot.slane %v792, %v805
        %807 = vrot.lane.b32.xlu0 %v799, 111
        %v808 = vpop.permute.xlu0 %807
        %809 = vrot.lane.b32.xlu0 %v806, 111
        %v810 = vpop.permute.xlu0 %809
        %v811 = vrot.slane %v808, 4
        %v812 = vrot.slane %v810, 4
        %v813 = vsel %vm325, %v811, %v812
        %v814 = vsel %vm449, %v808, %v813
        %816 = vst [vmem:[#allocation3 + $0x10] sm:$0x33] %v814
        %v817 = vld [vmem:[#allocation2] sm:$0x3f]
        %v818 = vmul.bf16 %v817, %v458
        %v820 = vcombine.low %v818, %v818
        %v822 = vunpack.c.l.s4 1983009808
        %v823 = vunpack.c.0.s8 %v822
        %v824 = vlaneseq
        %v825 = vshrl.u32 %v824, 7
        %v826 = vsub.s32 %v823, %v825
        %v827 = vrot.slane %v820, %v826
        %v829 = vunpack.c.l.s4 1983009808
        %v830 = vunpack.c.0.s8 %v829
        %v831 = vlaneseq
        %v832 = vshrl.u32 %v831, 7
        %v833 = vsub.s32 %v830, %v832
        %v834 = vrot.slane %v818, %v833
        %835 = vrot.lane.b32.xlu0 %v827, 110
        %v836 = vpop.permute.xlu0 %835
        %837 = vrot.lane.b32.xlu0 %v834, 110
        %v838 = vpop.permute.xlu0 %837
        %v839 = vrot.slane %v836, 4
        %v840 = vrot.slane %v838, 4
        %v841 = vsel %vm325, %v839, %v840
        %v842 = vsel %vm484, %v836, %v841
        %844 = vst [vmem:[#allocation3 + $0x10] sm:$0xcc] %v842
        %v845 = vld [vmem:[#allocation2] sm:$0x3f]
        %v846 = vmul.bf16 %v845, %v493
        %v848 = vcombine.high %v846, %v846
        %v850 = vunpack.c.l.s4 1983009808
        %v851 = vunpack.c.0.s8 %v850
        %v852 = vlaneseq
        %v853 = vshrl.u32 %v852, 7
        %v854 = vsub.s32 %v851, %v853
        %v855 = vrot.slane %v846, %v854
        %v857 = vunpack.c.l.s4 1983009808
        %v858 = vunpack.c.0.s8 %v857
        %v859 = vlaneseq
        %v860 = vshrl.u32 %v859, 7
        %v861 = vsub.s32 %v858, %v860
        %v862 = vrot.slane %v848, %v861
        %863 = vrot.lane.b32.xlu0 %v855, 96
        %v864 = vpop.permute.xlu0 %863
        %865 = vrot.lane.b32.xlu0 %v862, 96
        %v866 = vpop.permute.xlu0 %865
        %v867 = vrot.slane %v864, 4
        %v868 = vrot.slane %v866, 4
        %v869 = vsel %vm325, %v867, %v868
        %v870 = vsel %vm519, %v864, %v869
        %872 = vst [vmem:[#allocation3 + $0x18] sm:$0x33] %v870
        %v873 = vld [vmem:[#allocation2] sm:$0x3f]
        %v875 = vcombine.low %v873, %v873
        %v877 = vunpack.c.l.s4 1983009808
        %v878 = vunpack.c.0.s8 %v877
        %v879 = vlaneseq
        %v880 = vshrl.u32 %v879, 7
        %v881 = vsub.s32 %v878, %v880
        %v882 = vrot.slane %v875, %v881
        %v884 = vunpack.c.l.s4 1983009808
        %v885 = vunpack.c.0.s8 %v884
        %v886 = vlaneseq
        %v887 = vshrl.u32 %v886, 7
        %v888 = vsub.s32 %v885, %v887
        %v889 = vrot.slane %v873, %v888
        %890 = vrot.lane.b32.xlu0 %v882, 95
        %v891 = vpop.permute.xlu0 %890
        %892 = vrot.lane.b32.xlu0 %v889, 95
        %v893 = vpop.permute.xlu0 %892
        %v894 = vrot.slane %v891, 4
        %v895 = vrot.slane %v893, 4
        %v896 = vsel %vm325, %v894, %v895
        %v897 = vsel %vm547, %v891, %v896
        %899 = vst [vmem:[#allocation3 + $0x18] sm:$0xcc] %v897
        %v900 = vld [vmem:[#allocation2] sm:$0x3f]
        %v901 = vmul.bf16 %v900, %v556
        %v903 = vcombine.high %v901, %v901
        %v905 = vunpack.c.l.s4 1983009808
        %v906 = vunpack.c.0.s8 %v905
        %v907 = vlaneseq
        %v908 = vshrl.u32 %v907, 7
        %v909 = vsub.s32 %v906, %v908
        %v910 = vrot.slane %v901, %v909
        %v912 = vunpack.c.l.s4 1983009808
        %v913 = vunpack.c.0.s8 %v912
        %v914 = vlaneseq
        %v915 = vshrl.u32 %v914, 7
        %v916 = vsub.s32 %v913, %v915
        %v917 = vrot.slane %v903, %v916
        %918 = vrot.lane.b32.xlu0 %v910, 94
        %v919 = vpop.permute.xlu0 %918
        %920 = vrot.lane.b32.xlu0 %v917, 94
        %v921 = vpop.permute.xlu0 %920
        %v922 = vrot.slane %v919, 4
        %v923 = vrot.slane %v921, 4
        %v924 = vsel %vm325, %v922, %v923
        %v925 = vsel %vm582, %v919, %v924
        %927 = vst [vmem:[#allocation3 + $0x20] sm:$0x33] %v925
        %v928 = vld [vmem:[%s2] sm:$0x3]
        %v929 = vld [vmem:[#allocation3] sm:$0xff]
        %v930 = vld [vmem:[#allocation3 + $0x8] sm:$0xff]
        %v931 = vld [vmem:[#allocation3 + $0x10] sm:$0xff]
        %v932 = vld [vmem:[#allocation3 + $0x18] sm:$0xff]
        %v933 = vld [vmem:[#allocation3 + $0x20] sm:$0x33]
        %s934 = scalar_lea.vmem %s3, 4
        %v935 = vld [vmem:[%s934] sm:$0xf]
        %937 = vset.pattern.permute.xlu0 0
        %938 = vperm.xlu0 %937, %v935
        %v939 = vpop.permute.xlu0 %938
        %v946 = vunpack.c.l.b16 %v929
        %v947 = vunpack.c.h.b16 %v929
        %v948 = vunpack.c.l.b16 %v930
        %v949 = vunpack.c.h.b16 %v930
        %v950 = vunpack.c.l.b16 %v931
        %v951 = vunpack.c.h.b16 %v931
        %v952 = vunpack.c.l.b16 %v932
        %v953 = vunpack.c.h.b16 %v932
        %v954 = vunpack.c.l.b16 %v933
        %v955 = vunpack.c.h.b16 %v933
        %v956 = vpack.c.b16 %v948, %v946
        %v957 = vpack.c.b16 %v949, %v947
        %v958 = vpack.c.b16 %v952, %v950
        %v959 = vpack.c.b16 %v953, %v951
        %v960 = vpack.c.b16 %v954, %v954
        %v961 = vpack.c.b16 %v955, %v955
        %v967 = vsel %vm623, %v928, 0
        %v970 = vsel %vm627, %v960, 0
        %v973 = vsel %vm627, %v961, 0
        %975 = vmatprep.subr.bf16.mxu0 %v957
        %976 = vmatpush1.bf16.msra.mxu0 %v956
        %977 = vmatprep.subr.bf16.mxu0 %v959
        %978 = vmatpush1.bf16.msra.mxu0 %v958
        %979 = vmatprep.subr.bf16.mxu0 %v973
        %980 = vmatpush1.bf16.msra.mxu0 %v970
        %981 = vmatprep.subr.bf16.mxu0 0
        %982 = vmatpush1.bf16.msra.mxu0 0
        %983 = vmatprep.subr.bf16.mxu0 0
        %984 = vmatpush1.bf16.msra.mxu0 0
        %985 = vmatprep.subr.bf16.mxu0 0
        %986 = vmatpush1.bf16.msra.mxu0 0
        %987 = vmatprep.subr.bf16.mxu0 0
        %988 = vmatpush1.bf16.msra.mxu0 0
        %989 = vmatprep.subr.bf16.mxu0 0
        %990 = vmatpush1.bf16.msra.mxu0 0
        %991 = vmatprep.subr.bf16.mxu0 0
        %992 = vmatpush1.bf16.msra.mxu0 0
        %993 = vmatprep.subr.bf16.mxu0 0
        %994 = vmatpush1.bf16.msra.mxu0 0
        %995 = vmatprep.subr.bf16.mxu0 0
        %996 = vmatpush1.bf16.msra.mxu0 0
        %997 = vmatprep.subr.bf16.mxu0 0
        %998 = vmatpush1.bf16.msra.mxu0 0
        %999 = vmatprep.subr.bf16.mxu0 0
        %1000 = vmatpush1.bf16.msra.mxu0 0
        %1001 = vmatprep.subr.bf16.mxu0 0
        %1002 = vmatpush1.bf16.msra.mxu0 0
        %1003 = vmatprep.subr.bf16.mxu0 0
        %1004 = vmatpush1.bf16.msra.mxu0 0
        %1005 = vmatprep.subr.bf16.mxu0 0
        %1006 = vmatpush1.bf16.msra.mxu0 0
        %1007 = vmatprep.mubr.bf16.mxu0 0
        %1008 = vmatmul.mubr.bf16.gmra.mrb[0].mxu0 %v967
        %v1009 = vpop.f32.mrb[0].mxu0
        %v1010 = vadd.f32 %v939, %v1009
        %v1011 = vpop.f32.mrb[0].mxu0
        %v1012 = vadd.f32 %v939, %v1011
        %v1013 = vpop.f32.mrb[0].mxu0
        %v1014 = vpop.f32.mrb[0].mxu0
        %1015 = vdwg.mxu0
        %v1016 = vld [vmem:[%s235] sm:$0xf]
        %v1017 = vunpack.c.l.bf16 %v1016
        %v1019 = vcombine.high %v1017, %v1017
        %v1021 = vadd.f32 %v1010, %v1017
        %v1022 = vadd.f32 %v1012, %v1019
        %v1023 = vmax.f32 %v1021, 0.0
        %v1024 = vmax.f32 %v1022, 0.0
        %v1027 = vcombine.low %v1023, %v1024
        %1029 = vst [vmem:[%s230] sm:$0xff] %v1027
        %s1030 = sand.u32 %s138, 1
        %s1031 = scalar_lea.sflag [#allocation6], %s1030
        %s1032 = sand.u32 %s138, 1
        %s1033 = smul.addr %s1032, 8
        %s1034 = scalar_lea.vmem [#allocation7], %s1033
        // Predicated region
        $region45: #{tpu_custom_call.1} parent=39 // pred_check
          %p1035 = pneg %p148
        $region46: #{tpu_custom_call.1} parent=39 // pred_check_branch
          %1037 = sbr.rel (%p1035) target = $region48
        $region47: #{tpu_custom_call.1} parent=39 // pred_region
          %s1039 = ssub.s32 128, 128
          %1040 = vsyncadd %s1031, %s1039
          %s1041 = smul.addr %s20, 2
          %s1042 = smul.addr %s1041, 64
          %s1043 = scalar_lea.hbm %s5, %s1042
          %s1045 = sshll.u32 %s1034, 4
          %s1046 = int_to_ptr.vmem [resolvable:$true] %s1045
          %1048 = dma.vmem_to_hbm [thread:$0]  %s1046, 128, %s1043, %s1031
        $region48: #{tpu_custom_call.1} parent=39 // pred_fallthru
          _
      $region40: #{tpu_custom_call.1} parent=5 // pred_fallthru
        _
      %p1049 = scmp.le.s32.totalorder 2, %s15
      // Predicated region
      $region49: #{tpu_custom_call.1} parent=5 // pred_check
        %p1050 = pneg %p1049
      $region50: #{tpu_custom_call.1} parent=5 // pred_check_branch
        %1052 = sbr.rel (%p1050) target = $region52
      $region51: #{tpu_custom_call.1} parent=5 // pred_region
        %s1053 = ssub.s32 %s15, 2
        // Predicated region
        $region53: #{tpu_custom_call.1} parent=51 // pred_check
          %p1054 = pneg %p154
        $region54: #{tpu_custom_call.1} parent=51 // pred_check_branch
          %1056 = sbr.rel (%p1054) target = $region56
        $region55: #{tpu_custom_call.1} parent=51 // pred_region
          %s1057 = sand.u32 %s139, 1
          %s1058 = scalar_lea.sflag [#allocation6], %s1057
          %s1059 = sand.u32 %s139, 1
          %s1060 = smul.addr %s1059, 8
          %s1061 = scalar_lea.vmem [#allocation7], %s1060
          %1062 = dma.done %s1058, 128
        $region56: #{tpu_custom_call.1} parent=51 // pred_fallthru
          _
      $region52: #{tpu_custom_call.1} parent=5 // pred_fallthru
        _
    $region6: #{tpu_custom_call.1} parent=1 // loop_footer
      %s19 = sadd.s32 1, %s15
    $region7: #{tpu_custom_call.1} parent=1 // loop_footer_branch
      %14 = sbr.rel target = $region3
    $region8: #{tpu_custom_call.1} parent=1 // loop_exit
      _
    %1063 = vsyncpa [#allocation5], 1
    %s1064 = scalar_lea.sflag [#allocation5], 1
    %1065 = vsyncpa %s1064, 1
    %1066 = vsyncpa [#allocation6], 1
    %s1067 = scalar_lea.sflag [#allocation6], 1
    %1068 = vsyncpa %s1067, 1

</llo_original>
